<compile_context>
chip_gen: v7x
topology: tpu7x:2x2x1
jax: 0.10.0
libtpu: 0.0.40
codegen_flags: <defaults>
</compile_context>

<pallas_src>
import jax
import jax.numpy as jnp
import numpy as np
from jax.experimental import pallas as pl
from jax.experimental.pallas import tpu as pltpu

_LANE = 128
_SUBLANE = 8


def _round_up(a, b):
    return (a + b - 1) // b * b


def _relu_matmul_kernel(p_ref, w_ref, o_ref):
    # ReLU fused directly into the conv-as-matmul (relu(0)=0 keeps the zero
    # padding / zero-padded rows+columns exact).  bf16 operands, f32 accumulate,
    # full-128-lane f32 store (lane-dense output).
    x = jnp.maximum(p_ref[...], 0)
    o_ref[...] = jnp.dot(x, w_ref[...], preferred_element_type=jnp.float32)


def relu_conv2d(x_nchw, w_oihw):
    """relu(x) followed by 3x3, stride-1, pad-1, bias-free conv (NCHW in/out)."""
    N, Cin, H, W = x_nchw.shape
    Cout, Cin2, KH, KW = w_oihw.shape
    assert Cin2 == Cin and (KH, KW) == (3, 3), "specialized for 3x3 stride-1 pad-1"

    K = KH * KW * Cin                      # 1728
    Kp = _round_up(K, _LANE)               # 1792 (lane-aligned reduction dim)
    CoutP = _round_up(Cout, _LANE)         # 128  (lane-dense output stores)
    M_total = N * H * W                    # all images share the matmul M dim
    BM = min(1024, _round_up(M_total, _SUBLANE))
    M_pad = _round_up(M_total, BM)

    # ---- host glue (one XLA fusion under jit): NCHW->NHWC, pad, 9-tap im2col ----
    x_nhwc = jnp.transpose(x_nchw, (0, 2, 3, 1)).astype(jnp.bfloat16)   # (N,H,W,Cin)
    x_pad = jnp.pad(x_nhwc, ((0, 0), (1, 1), (1, 1), (0, 0)))           # (N,H+2,W+2,Cin)
    cols = [x_pad[:, kh:kh + H, kw:kw + W, :] for kh in range(KH) for kw in range(KW)]
    patches = jnp.concatenate(cols, axis=-1).reshape(M_total, K)        # (M, 9*Cin)
    patches = jnp.pad(patches, ((0, M_pad - M_total), (0, Kp - K)))     # zero pad M, K

    # Weight: OIHW -> (kh, kw, ci, co) -> (K, Cout); zero-pad K and Cout.
    w_flat = jnp.transpose(w_oihw, (2, 3, 1, 0)).reshape(K, Cout).astype(jnp.bfloat16)
    w_flat = jnp.pad(w_flat, ((0, Kp - K), (0, CoutP - Cout)))          # (Kp, 128)

    out = pl.pallas_call(
        _relu_matmul_kernel,
        out_shape=jax.ShapeDtypeStruct((M_pad, CoutP), jnp.float32),
        grid=(M_pad // BM,),
        in_specs=[
            pl.BlockSpec((BM, Kp), lambda m: (m, 0)),        # patch rows per step
            pl.BlockSpec((Kp, CoutP), lambda m: (0, 0)),     # weight resident
        ],
        out_specs=pl.BlockSpec((BM, CoutP), lambda m: (m, 0)),
        compiler_params=pltpu.CompilerParams(
            dimension_semantics=("parallel",),
        ),
    )(patches, w_flat)

    # Drop row padding + the Cout lane padding, back to NCHW.
    out = out[:M_total, :Cout].reshape(N, H, W, Cout)
    return jnp.transpose(out, (0, 3, 1, 2))


if __name__ == "__main__":
    key = jax.random.PRNGKey(0)
    kx, kw = jax.random.split(key)

    # Shapes implied by the module: x451 is [1, 192, 7, 7]; conv is 192 -> 48, 3x3.
    N, Cin, H, W = 1, 192, 7, 7
    Cout, KH, KW = 48, 3, 3

    x = jax.random.normal(kx, (N, Cin, H, W), dtype=jnp.float32)
    fan_in = Cin * KH * KW
    w = jax.random.normal(kw, (Cout, Cin, KH, KW), dtype=jnp.float32) * (2.0 / fan_in) ** 0.5

    fwd = jax.jit(relu_conv2d)
    out = jax.block_until_ready(fwd(x, w))

    # Full-precision XLA reference; tolerance loosened because the kernel uses
    # bf16 MXU operands (f32 accumulation).
    ref = jax.lax.conv_general_dilated(
        jnp.maximum(x, 0.0), w,
        window_strides=(1, 1), padding=((1, 1), (1, 1)),
        dimension_numbers=("NCHW", "OIHW", "NCHW"),
        precision=jax.lax.Precision.HIGHEST,
    )
    assert out.shape == (N, Cout, H, W), out.shape
    np.testing.assert_allclose(np.asarray(out), np.asarray(ref), rtol=2e-2, atol=2e-2)

    print("KERNEL_OK")
</pallas_src>

<mosaic_0001>
module attributes {stable_mosaic.version = 11 : i64} {
  func.func @_relu_matmul_kernel(%arg0: i32, %arg1: memref<56x1792xbf16, #tpu.memory_space<vmem>>, %arg2: memref<1792x128xbf16, #tpu.memory_space<vmem>>, %arg3: memref<56x128xf32, #tpu.memory_space<vmem>>) attributes {dimension_semantics = [#tpu.dimension_semantics<parallel>], iteration_bounds = array<i64: 1>, scalar_prefetch = 0 : i64, scratch_operands = 0 : i64, tpu.core_type = #tpu.core_type<tc>, window_params = [{transform_indices = @transform_0, window_bounds = array<i64: 56, 1792>}, {pipeline_mode = #tpu.pipeline_mode<synchronous>, transform_indices = @transform_1, window_bounds = array<i64: 1792, 128>}, {transform_indices = @transform_2, window_bounds = array<i64: 56, 128>}]} {
    %c0 = arith.constant 0 : index
    %c0_0 = arith.constant 0 : index
    %0 = vector.load %arg1[%c0, %c0_0] : memref<56x1792xbf16, #tpu.memory_space<vmem>>, vector<56x1792xbf16>
    %cst = arith.constant 0.000000e+00 : bf16
    %1 = vector.broadcast %cst : bf16 to vector<56x1792xbf16>
    %2 = arith.maximumf %0, %1 : vector<56x1792xbf16>
    %c0_1 = arith.constant 0 : index
    %c0_2 = arith.constant 0 : index
    %3 = vector.load %arg2[%c0_1, %c0_2] : memref<1792x128xbf16, #tpu.memory_space<vmem>>, vector<1792x128xbf16>
    %cst_3 = arith.constant dense<0.000000e+00> : vector<56x128xf32>
    %4 = tpu.matmul %2, %3, %cst_3 {dimension_numbers = #tpu.dot_dimension_numbers<[1], [0], [0], [1], [0, 0, 1, 1], [], []>} : vector<56x1792xbf16>, vector<1792x128xbf16>, vector<56x128xf32> -> vector<56x128xf32>
    %c0_4 = arith.constant 0 : index
    %c0_5 = arith.constant 0 : index
    %5 = vector.load %arg3[%c0_4, %c0_5] : memref<56x128xf32, #tpu.memory_space<vmem>>, vector<56x128xf32>
    tpu.vector_store %arg3[%c0_4, %c0_5], %4 {strides = array<i32>} : memref<56x128xf32, #tpu.memory_space<vmem>>, vector<56x128xf32>,
    return
  }
  func.func @transform_0(%arg0: i32) -> (i32, i32) {
    %c0_i32 = arith.constant 0 : i32
    %c0_i32_0 = arith.constant 0 : i32
    return %arg0, %c0_i32 : i32, i32
  }
  func.func @transform_1(%arg0: i32) -> (i32, i32) {
    %c0_i32 = arith.constant 0 : i32
    %c0_i32_0 = arith.constant 0 : i32
    %c0_i32_1 = arith.constant 0 : i32
    return %c0_i32, %c0_i32_0 : i32, i32
  }
  func.func @transform_2(%arg0: i32) -> (i32, i32) {
    %c0_i32 = arith.constant 0 : i32
    %c0_i32_0 = arith.constant 0 : i32
    return %arg0, %c0_i32 : i32, i32
  }
}

</mosaic_0001>

<llo_original>
// kernel: relu_conv2d.1
$region0: #{relu_conv2d.1}
  #allocation0 [shape = 'u32[]', space=smem, size = 0x4, offset = 0x4, fixed_abs, tag = 'smem constant byte address 0x4 - core index']
  #allocation1 [shape = 'u32[144,128]{1,0:T(1,128)}', space=vmem, size = 0x12000, scoped, tag = 'internal scratch']
  %s0 = inlined_call_operand.vmem [shape: bf16[56,1792], index: 0, kind: input, shape index: {}]
  %s1 = inlined_call_operand.vmem [shape: bf16[1792,128], index: 1, kind: input, shape index: {}]
  %s2 = inlined_call_operand.vmem [shape: f32[56,128], index: 2, kind: output, shape index: {}]
  %s3 = sld [smem:[#allocation0]]
  $region18: #{relu_conv2d.1} parent=0
    _
  %s5 = ssub.s32 1, %s3
  %s6 = scalar_select 0, %s5, %s3
  // Predicated region
  $region2: #{relu_conv2d.1} parent=0 // pred_check
    _
  $region3: #{relu_conv2d.1} parent=0 // pred_check_branch
    %8 = sbr.rel (0) target = $region5
  $region4: #{relu_conv2d.1} parent=0 // pred_region
    _
  $region5: #{relu_conv2d.1} parent=0 // pred_fallthru
    _
  // Predicated region
  $region6: #{relu_conv2d.1} parent=0 // pred_check
    _
  $region7: #{relu_conv2d.1} parent=0 // pred_check_branch
    %10 = sbr.rel (0) target = $region9
  $region8: #{relu_conv2d.1} parent=0 // pred_region
    _
  $region9: #{relu_conv2d.1} parent=0 // pred_fallthru
    _
  %v12 = vld [vmem:[%s0] sm:$0xff]
  %v13 = vld [vmem:[%s0 + $0x8] sm:$0xff]
  %v14 = vld [vmem:[%s0 + $0x10] sm:$0xff]
  %v15 = vld [vmem:[%s0 + $0x18] sm:$0xff]
  %v16 = vld [vmem:[%s0 + $0x20] sm:$0xff]
  %v17 = vld [vmem:[%s0 + $0x28] sm:$0xff]
  %v18 = vld [vmem:[%s0 + $0x30] sm:$0xff]
  %v19 = vld [vmem:[%s0 + $0x38] sm:$0xff]
  %v20 = vld [vmem:[%s0 + $0x40] sm:$0xff]
  %v21 = vld [vmem:[%s0 + $0x48] sm:$0xff]
  %v22 = vld [vmem:[%s0 + $0x50] sm:$0xff]
  %v23 = vld [vmem:[%s0 + $0x58] sm:$0xff]
  %v24 = vld [vmem:[%s0 + $0x60] sm:$0xff]
  %v25 = vld [vmem:[%s0 + $0x68] sm:$0xff]
  %v26 = vld [vmem:[%s0 + $0x70] sm:$0xff]
  %v27 = vld [vmem:[%s0 + $0x78] sm:$0xff]
  %v28 = vld [vmem:[%s0 + $0x80] sm:$0xff]
  %v29 = vld [vmem:[%s0 + $0x88] sm:$0xff]
  %v30 = vld [vmem:[%s0 + $0x90] sm:$0xff]
  %v31 = vld [vmem:[%s0 + $0x98] sm:$0xff]
  %v32 = vld [vmem:[%s0 + $0xa0] sm:$0xff]
  %v33 = vld [vmem:[%s0 + $0xa8] sm:$0xff]
  %v34 = vld [vmem:[%s0 + $0xb0] sm:$0xff]
  %v35 = vld [vmem:[%s0 + $0xb8] sm:$0xff]
  %v36 = vld [vmem:[%s0 + $0xc0] sm:$0xff]
  %v37 = vld [vmem:[%s0 + $0xc8] sm:$0xff]
  %v38 = vld [vmem:[%s0 + $0xd0] sm:$0xff]
  %v39 = vld [vmem:[%s0 + $0xd8] sm:$0xff]
  %v40 = vld [vmem:[%s0 + $0xe0] sm:$0xff]
  %v41 = vld [vmem:[%s0 + $0xe8] sm:$0xff]
  %v42 = vld [vmem:[%s0 + $0xf0] sm:$0xff]
  %v43 = vld [vmem:[%s0 + $0xf8] sm:$0xff]
  %v44 = vld [vmem:[%s0 + $0x100] sm:$0xff]
  %v45 = vld [vmem:[%s0 + $0x108] sm:$0xff]
  %v46 = vld [vmem:[%s0 + $0x110] sm:$0xff]
  %v47 = vld [vmem:[%s0 + $0x118] sm:$0xff]
  %v48 = vld [vmem:[%s0 + $0x120] sm:$0xff]
  %v49 = vld [vmem:[%s0 + $0x128] sm:$0xff]
  %v50 = vld [vmem:[%s0 + $0x130] sm:$0xff]
  %v51 = vld [vmem:[%s0 + $0x138] sm:$0xff]
  %v52 = vld [vmem:[%s0 + $0x140] sm:$0xff]
  %v53 = vld [vmem:[%s0 + $0x148] sm:$0xff]
  %v54 = vld [vmem:[%s0 + $0x150] sm:$0xff]
  %v55 = vld [vmem:[%s0 + $0x158] sm:$0xff]
  %v56 = vld [vmem:[%s0 + $0x160] sm:$0xff]
  %v57 = vld [vmem:[%s0 + $0x168] sm:$0xff]
  %v58 = vld [vmem:[%s0 + $0x170] sm:$0xff]
  %v59 = vld [vmem:[%s0 + $0x178] sm:$0xff]
  %v60 = vld [vmem:[%s0 + $0x180] sm:$0xff]
  %v61 = vmax.bf16 %v12, 0
  %v62 = vmax.bf16 %v13, 0
  %v63 = vmax.bf16 %v14, 0
  %v64 = vmax.bf16 %v15, 0
  %v65 = vmax.bf16 %v16, 0
  %v66 = vmax.bf16 %v17, 0
  %v67 = vmax.bf16 %v18, 0
  %v68 = vmax.bf16 %v19, 0
  %v69 = vmax.bf16 %v20, 0
  %v70 = vmax.bf16 %v21, 0
  %v71 = vmax.bf16 %v22, 0
  %v72 = vmax.bf16 %v23, 0
  %v73 = vmax.bf16 %v24, 0
  %v74 = vmax.bf16 %v25, 0
  %v75 = vmax.bf16 %v26, 0
  %v76 = vmax.bf16 %v27, 0
  %v77 = vmax.bf16 %v28, 0
  %v78 = vmax.bf16 %v29, 0
  %v79 = vmax.bf16 %v30, 0
  %v80 = vmax.bf16 %v31, 0
  %v81 = vmax.bf16 %v32, 0
  %v82 = vmax.bf16 %v33, 0
  %v83 = vmax.bf16 %v34, 0
  %v84 = vmax.bf16 %v35, 0
  %v85 = vmax.bf16 %v36, 0
  %v86 = vmax.bf16 %v37, 0
  %v87 = vmax.bf16 %v38, 0
  %v88 = vmax.bf16 %v39, 0
  %v89 = vmax.bf16 %v40, 0
  %v90 = vmax.bf16 %v41, 0
  %v91 = vmax.bf16 %v42, 0
  %v92 = vmax.bf16 %v43, 0
  %v93 = vmax.bf16 %v44, 0
  %v94 = vmax.bf16 %v45, 0
  %v95 = vmax.bf16 %v46, 0
  %v96 = vmax.bf16 %v47, 0
  %v97 = vmax.bf16 %v48, 0
  %v98 = vmax.bf16 %v49, 0
  %v99 = vmax.bf16 %v50, 0
  %v100 = vmax.bf16 %v51, 0
  %v101 = vmax.bf16 %v52, 0
  %v102 = vmax.bf16 %v53, 0
  %v103 = vmax.bf16 %v54, 0
  %v104 = vmax.bf16 %v55, 0
  %v105 = vmax.bf16 %v56, 0
  %v106 = vmax.bf16 %v57, 0
  %v107 = vmax.bf16 %v58, 0
  %v108 = vmax.bf16 %v59, 0
  %v109 = vmax.bf16 %v60, 0
  %v110 = vld [vmem:[%s1] sm:$0xf]
  %v111 = vld [vmem:[%s1 + $0x4] sm:$0xf]
  %v112 = vld [vmem:[%s1 + $0x8] sm:$0xf]
  %v113 = vld [vmem:[%s1 + $0xc] sm:$0xf]
  %v114 = vld [vmem:[%s1 + $0x10] sm:$0xf]
  %v115 = vld [vmem:[%s1 + $0x14] sm:$0xf]
  %v116 = vld [vmem:[%s1 + $0x18] sm:$0xf]
  %v117 = vld [vmem:[%s1 + $0x1c] sm:$0xf]
  %v118 = vld [vmem:[%s1 + $0x20] sm:$0xf]
  %v119 = vld [vmem:[%s1 + $0x24] sm:$0xf]
  %v120 = vld [vmem:[%s1 + $0x28] sm:$0xf]
  %v121 = vld [vmem:[%s1 + $0x2c] sm:$0xf]
  %v122 = vld [vmem:[%s1 + $0x30] sm:$0xf]
  %v123 = vld [vmem:[%s1 + $0x34] sm:$0xf]
  %v124 = vld [vmem:[%s1 + $0x38] sm:$0xf]
  %v125 = vld [vmem:[%s1 + $0x3c] sm:$0xf]
  %v126 = vld [vmem:[%s1 + $0x40] sm:$0xf]
  %v127 = vld [vmem:[%s1 + $0x44] sm:$0xf]
  %v128 = vld [vmem:[%s1 + $0x48] sm:$0xf]
  %v129 = vld [vmem:[%s1 + $0x4c] sm:$0xf]
  %v130 = vld [vmem:[%s1 + $0x50] sm:$0xf]
  %v131 = vld [vmem:[%s1 + $0x54] sm:$0xf]
  %v132 = vld [vmem:[%s1 + $0x58] sm:$0xf]
  %v133 = vld [vmem:[%s1 + $0x5c] sm:$0xf]
  %v134 = vld [vmem:[%s1 + $0x60] sm:$0xf]
  %v135 = vld [vmem:[%s1 + $0x64] sm:$0xf]
  %v136 = vld [vmem:[%s1 + $0x68] sm:$0xf]
  %v137 = vld [vmem:[%s1 + $0x6c] sm:$0xf]
  %v138 = vld [vmem:[%s1 + $0x70] sm:$0xf]
  %v139 = vld [vmem:[%s1 + $0x74] sm:$0xf]
  %v140 = vld [vmem:[%s1 + $0x78] sm:$0xf]
  %v141 = vld [vmem:[%s1 + $0x7c] sm:$0xf]
  %v142 = vld [vmem:[%s1 + $0x80] sm:$0xf]
  %v143 = vld [vmem:[%s1 + $0x84] sm:$0xf]
  %v144 = vld [vmem:[%s1 + $0x88] sm:$0xf]
  %v145 = vld [vmem:[%s1 + $0x8c] sm:$0xf]
  %v146 = vld [vmem:[%s1 + $0x90] sm:$0xf]
  %v147 = vld [vmem:[%s1 + $0x94] sm:$0xf]
  %v148 = vld [vmem:[%s1 + $0x98] sm:$0xf]
  %v149 = vld [vmem:[%s1 + $0x9c] sm:$0xf]
  %v150 = vld [vmem:[%s1 + $0xa0] sm:$0xf]
  %v151 = vld [vmem:[%s1 + $0xa4] sm:$0xf]
  %v152 = vld [vmem:[%s1 + $0xa8] sm:$0xf]
  %v153 = vld [vmem:[%s1 + $0xac] sm:$0xf]
  %v154 = vld [vmem:[%s1 + $0xb0] sm:$0xf]
  %v155 = vld [vmem:[%s1 + $0xb4] sm:$0xf]
  %v156 = vld [vmem:[%s1 + $0xb8] sm:$0xf]
  %v157 = vld [vmem:[%s1 + $0xbc] sm:$0xf]
  %v158 = vld [vmem:[%s1 + $0xc0] sm:$0xf]
  %v159 = vld [vmem:[%s1 + $0xc4] sm:$0xf]
  %v160 = vld [vmem:[%s1 + $0xc8] sm:$0xf]
  %v161 = vld [vmem:[%s1 + $0xcc] sm:$0xf]
  %v162 = vld [vmem:[%s1 + $0xd0] sm:$0xf]
  %v163 = vld [vmem:[%s1 + $0xd4] sm:$0xf]
  %v164 = vld [vmem:[%s1 + $0xd8] sm:$0xf]
  %v165 = vld [vmem:[%s1 + $0xdc] sm:$0xf]
  %v166 = vld [vmem:[%s1 + $0xe0] sm:$0xf]
  %v167 = vld [vmem:[%s1 + $0xe4] sm:$0xf]
  %v168 = vld [vmem:[%s1 + $0xe8] sm:$0xf]
  %v169 = vld [vmem:[%s1 + $0xec] sm:$0xf]
  %v170 = vld [vmem:[%s1 + $0xf0] sm:$0xf]
  %v171 = vld [vmem:[%s1 + $0xf4] sm:$0xf]
  %v172 = vld [vmem:[%s1 + $0xf8] sm:$0xf]
  %v173 = vld [vmem:[%s1 + $0xfc] sm:$0xf]
  %v174 = vld [vmem:[%s1 + $0x100] sm:$0xf]
  %v175 = vld [vmem:[%s1 + $0x104] sm:$0xf]
  %v176 = vld [vmem:[%s1 + $0x108] sm:$0xf]
  %v177 = vld [vmem:[%s1 + $0x10c] sm:$0xf]
  %v178 = vld [vmem:[%s1 + $0x110] sm:$0xf]
  %v179 = vld [vmem:[%s1 + $0x114] sm:$0xf]
  %v180 = vld [vmem:[%s1 + $0x118] sm:$0xf]
  %v181 = vld [vmem:[%s1 + $0x11c] sm:$0xf]
  %v182 = vld [vmem:[%s1 + $0x120] sm:$0xf]
  %v183 = vld [vmem:[%s1 + $0x124] sm:$0xf]
  %v184 = vld [vmem:[%s1 + $0x128] sm:$0xf]
  %v185 = vld [vmem:[%s1 + $0x12c] sm:$0xf]
  %v186 = vld [vmem:[%s1 + $0x130] sm:$0xf]
  %v187 = vld [vmem:[%s1 + $0x134] sm:$0xf]
  %v188 = vld [vmem:[%s1 + $0x138] sm:$0xf]
  %v189 = vld [vmem:[%s1 + $0x13c] sm:$0xf]
  %v190 = vld [vmem:[%s1 + $0x140] sm:$0xf]
  %v191 = vld [vmem:[%s1 + $0x144] sm:$0xf]
  %v192 = vld [vmem:[%s1 + $0x148] sm:$0xf]
  %v193 = vld [vmem:[%s1 + $0x14c] sm:$0xf]
  %v194 = vld [vmem:[%s1 + $0x150] sm:$0xf]
  %v195 = vld [vmem:[%s1 + $0x154] sm:$0xf]
  %v196 = vld [vmem:[%s1 + $0x158] sm:$0xf]
  %v197 = vld [vmem:[%s1 + $0x15c] sm:$0xf]
  %v198 = vld [vmem:[%s1 + $0x160] sm:$0xf]
  %v199 = vld [vmem:[%s1 + $0x164] sm:$0xf]
  %v200 = vld [vmem:[%s1 + $0x168] sm:$0xf]
  %v201 = vld [vmem:[%s1 + $0x16c] sm:$0xf]
  %v202 = vld [vmem:[%s1 + $0x170] sm:$0xf]
  %v203 = vld [vmem:[%s1 + $0x174] sm:$0xf]
  %v204 = vld [vmem:[%s1 + $0x178] sm:$0xf]
  %v205 = vld [vmem:[%s1 + $0x17c] sm:$0xf]
  %v206 = vld [vmem:[%s1 + $0x180] sm:$0xf]
  %v207 = vld [vmem:[%s1 + $0x184] sm:$0xf]
  %v208 = vld [vmem:[%s1 + $0x188] sm:$0xf]
  %v209 = vld [vmem:[%s1 + $0x18c] sm:$0xf]
  %v210 = vld [vmem:[%s1 + $0x190] sm:$0xf]
  %v211 = vld [vmem:[%s1 + $0x194] sm:$0xf]
  %v212 = vld [vmem:[%s1 + $0x198] sm:$0xf]
  %v213 = vld [vmem:[%s1 + $0x19c] sm:$0xf]
  %v214 = vld [vmem:[%s1 + $0x1a0] sm:$0xf]
  %v215 = vld [vmem:[%s1 + $0x1a4] sm:$0xf]
  %v216 = vld [vmem:[%s1 + $0x1a8] sm:$0xf]
  %v217 = vld [vmem:[%s1 + $0x1ac] sm:$0xf]
  %v218 = vld [vmem:[%s1 + $0x1b0] sm:$0xf]
  %v219 = vld [vmem:[%s1 + $0x1b4] sm:$0xf]
  %v220 = vld [vmem:[%s1 + $0x1b8] sm:$0xf]
  %v221 = vld [vmem:[%s1 + $0x1bc] sm:$0xf]
  %v222 = vld [vmem:[%s1 + $0x1c0] sm:$0xf]
  %v223 = vld [vmem:[%s1 + $0x1c4] sm:$0xf]
  %v224 = vld [vmem:[%s1 + $0x1c8] sm:$0xf]
  %v225 = vld [vmem:[%s1 + $0x1cc] sm:$0xf]
  %v226 = vld [vmem:[%s1 + $0x1d0] sm:$0xf]
  %v227 = vld [vmem:[%s1 + $0x1d4] sm:$0xf]
  %v228 = vld [vmem:[%s1 + $0x1d8] sm:$0xf]
  %v229 = vld [vmem:[%s1 + $0x1dc] sm:$0xf]
  %v230 = vld [vmem:[%s1 + $0x1e0] sm:$0xf]
  %v231 = vld [vmem:[%s1 + $0x1e4] sm:$0xf]
  %v232 = vld [vmem:[%s1 + $0x1e8] sm:$0xf]
  %v233 = vld [vmem:[%s1 + $0x1ec] sm:$0xf]
  %v234 = vld [vmem:[%s1 + $0x1f0] sm:$0xf]
  %v235 = vld [vmem:[%s1 + $0x1f4] sm:$0xf]
  %v236 = vld [vmem:[%s1 + $0x1f8] sm:$0xf]
  %v237 = vld [vmem:[%s1 + $0x1fc] sm:$0xf]
  %v238 = vld [vmem:[%s1 + $0x200] sm:$0xf]
  %v239 = vld [vmem:[%s1 + $0x204] sm:$0xf]
  %v240 = vld [vmem:[%s1 + $0x208] sm:$0xf]
  %v241 = vld [vmem:[%s1 + $0x20c] sm:$0xf]
  %v242 = vld [vmem:[%s1 + $0x210] sm:$0xf]
  %v243 = vld [vmem:[%s1 + $0x214] sm:$0xf]
  %v244 = vld [vmem:[%s1 + $0x218] sm:$0xf]
  %v245 = vld [vmem:[%s1 + $0x21c] sm:$0xf]
  %v246 = vld [vmem:[%s1 + $0x220] sm:$0xf]
  %v247 = vld [vmem:[%s1 + $0x224] sm:$0xf]
  %v248 = vld [vmem:[%s1 + $0x228] sm:$0xf]
  %v249 = vld [vmem:[%s1 + $0x22c] sm:$0xf]
  %v250 = vld [vmem:[%s1 + $0x230] sm:$0xf]
  %v251 = vld [vmem:[%s1 + $0x234] sm:$0xf]
  %v252 = vld [vmem:[%s1 + $0x238] sm:$0xf]
  %v253 = vld [vmem:[%s1 + $0x23c] sm:$0xf]
  %v254 = vld [vmem:[%s1 + $0x240] sm:$0xf]
  %v255 = vld [vmem:[%s1 + $0x244] sm:$0xf]
  %v256 = vld [vmem:[%s1 + $0x248] sm:$0xf]
  %v257 = vld [vmem:[%s1 + $0x24c] sm:$0xf]
  %v258 = vld [vmem:[%s1 + $0x250] sm:$0xf]
  %v259 = vld [vmem:[%s1 + $0x254] sm:$0xf]
  %v260 = vld [vmem:[%s1 + $0x258] sm:$0xf]
  %v261 = vld [vmem:[%s1 + $0x25c] sm:$0xf]
  %v262 = vld [vmem:[%s1 + $0x260] sm:$0xf]
  %v263 = vld [vmem:[%s1 + $0x264] sm:$0xf]
  %v264 = vld [vmem:[%s1 + $0x268] sm:$0xf]
  %v265 = vld [vmem:[%s1 + $0x26c] sm:$0xf]
  %v266 = vld [vmem:[%s1 + $0x270] sm:$0xf]
  %v267 = vld [vmem:[%s1 + $0x274] sm:$0xf]
  %v268 = vld [vmem:[%s1 + $0x278] sm:$0xf]
  %v269 = vld [vmem:[%s1 + $0x27c] sm:$0xf]
  %v270 = vld [vmem:[%s1 + $0x280] sm:$0xf]
  %v271 = vld [vmem:[%s1 + $0x284] sm:$0xf]
  %v272 = vld [vmem:[%s1 + $0x288] sm:$0xf]
  %v273 = vld [vmem:[%s1 + $0x28c] sm:$0xf]
  %v274 = vld [vmem:[%s1 + $0x290] sm:$0xf]
  %v275 = vld [vmem:[%s1 + $0x294] sm:$0xf]
  %v276 = vld [vmem:[%s1 + $0x298] sm:$0xf]
  %v277 = vld [vmem:[%s1 + $0x29c] sm:$0xf]
  %v278 = vld [vmem:[%s1 + $0x2a0] sm:$0xf]
  %v279 = vld [vmem:[%s1 + $0x2a4] sm:$0xf]
  %v280 = vld [vmem:[%s1 + $0x2a8] sm:$0xf]
  %v281 = vld [vmem:[%s1 + $0x2ac] sm:$0xf]
  %v282 = vld [vmem:[%s1 + $0x2b0] sm:$0xf]
  %v283 = vld [vmem:[%s1 + $0x2b4] sm:$0xf]
  %v284 = vld [vmem:[%s1 + $0x2b8] sm:$0xf]
  %v285 = vld [vmem:[%s1 + $0x2bc] sm:$0xf]
  %v286 = vld [vmem:[%s1 + $0x2c0] sm:$0xf]
  %v287 = vld [vmem:[%s1 + $0x2c4] sm:$0xf]
  %v288 = vld [vmem:[%s1 + $0x2c8] sm:$0xf]
  %v289 = vld [vmem:[%s1 + $0x2cc] sm:$0xf]
  %v290 = vld [vmem:[%s1 + $0x2d0] sm:$0xf]
  %v291 = vld [vmem:[%s1 + $0x2d4] sm:$0xf]
  %v292 = vld [vmem:[%s1 + $0x2d8] sm:$0xf]
  %v293 = vld [vmem:[%s1 + $0x2dc] sm:$0xf]
  %v294 = vld [vmem:[%s1 + $0x2e0] sm:$0xf]
  %v295 = vld [vmem:[%s1 + $0x2e4] sm:$0xf]
  %v296 = vld [vmem:[%s1 + $0x2e8] sm:$0xf]
  %v297 = vld [vmem:[%s1 + $0x2ec] sm:$0xf]
  %v298 = vld [vmem:[%s1 + $0x2f0] sm:$0xf]
  %v299 = vld [vmem:[%s1 + $0x2f4] sm:$0xf]
  %v300 = vld [vmem:[%s1 + $0x2f8] sm:$0xf]
  %v301 = vld [vmem:[%s1 + $0x2fc] sm:$0xf]
  %v302 = vld [vmem:[%s1 + $0x300] sm:$0xf]
  %v303 = vld [vmem:[%s1 + $0x304] sm:$0xf]
  %v304 = vld [vmem:[%s1 + $0x308] sm:$0xf]
  %v305 = vld [vmem:[%s1 + $0x30c] sm:$0xf]
  %v306 = vld [vmem:[%s1 + $0x310] sm:$0xf]
  %v307 = vld [vmem:[%s1 + $0x314] sm:$0xf]
  %v308 = vld [vmem:[%s1 + $0x318] sm:$0xf]
  %v309 = vld [vmem:[%s1 + $0x31c] sm:$0xf]
  %v310 = vld [vmem:[%s1 + $0x320] sm:$0xf]
  %v311 = vld [vmem:[%s1 + $0x324] sm:$0xf]
  %v312 = vld [vmem:[%s1 + $0x328] sm:$0xf]
  %v313 = vld [vmem:[%s1 + $0x32c] sm:$0xf]
  %v314 = vld [vmem:[%s1 + $0x330] sm:$0xf]
  %v315 = vld [vmem:[%s1 + $0x334] sm:$0xf]
  %v316 = vld [vmem:[%s1 + $0x338] sm:$0xf]
  %v317 = vld [vmem:[%s1 + $0x33c] sm:$0xf]
  %v318 = vld [vmem:[%s1 + $0x340] sm:$0xf]
  %v319 = vld [vmem:[%s1 + $0x344] sm:$0xf]
  %v320 = vld [vmem:[%s1 + $0x348] sm:$0xf]
  %v321 = vld [vmem:[%s1 + $0x34c] sm:$0xf]
  %v322 = vld [vmem:[%s1 + $0x350] sm:$0xf]
  %v323 = vld [vmem:[%s1 + $0x354] sm:$0xf]
  %v324 = vld [vmem:[%s1 + $0x358] sm:$0xf]
  %v325 = vld [vmem:[%s1 + $0x35c] sm:$0xf]
  %v326 = vld [vmem:[%s1 + $0x360] sm:$0xf]
  %v327 = vld [vmem:[%s1 + $0x364] sm:$0xf]
  %v328 = vld [vmem:[%s1 + $0x368] sm:$0xf]
  %v329 = vld [vmem:[%s1 + $0x36c] sm:$0xf]
  %v330 = vld [vmem:[%s1 + $0x370] sm:$0xf]
  %v331 = vld [vmem:[%s1 + $0x374] sm:$0xf]
  %v332 = vld [vmem:[%s1 + $0x378] sm:$0xf]
  %v333 = vld [vmem:[%s1 + $0x37c] sm:$0xf]
  %v383 = vunpack.c.l.b16 %v61
  %v384 = vunpack.c.h.b16 %v61
  %v385 = vunpack.c.l.b16 %v62
  %v386 = vunpack.c.h.b16 %v62
  %v387 = vunpack.c.l.b16 %v63
  %v388 = vunpack.c.h.b16 %v63
  %v389 = vunpack.c.l.b16 %v64
  %v390 = vunpack.c.h.b16 %v64
  %v391 = vunpack.c.l.b16 %v65
  %v392 = vunpack.c.h.b16 %v65
  %v393 = vunpack.c.l.b16 %v66
  %v394 = vunpack.c.h.b16 %v66
  %v395 = vunpack.c.l.b16 %v67
  %v396 = vunpack.c.h.b16 %v67
  %v397 = vunpack.c.l.b16 %v68
  %v398 = vunpack.c.h.b16 %v68
  %v399 = vunpack.c.l.b16 %v69
  %v400 = vunpack.c.h.b16 %v69
  %v401 = vunpack.c.l.b16 %v70
  %v402 = vunpack.c.h.b16 %v70
  %v403 = vunpack.c.l.b16 %v71
  %v404 = vunpack.c.h.b16 %v71
  %v405 = vunpack.c.l.b16 %v72
  %v406 = vunpack.c.h.b16 %v72
  %v407 = vunpack.c.l.b16 %v73
  %v408 = vunpack.c.h.b16 %v73
  %v409 = vunpack.c.l.b16 %v74
  %v410 = vunpack.c.h.b16 %v74
  %v411 = vunpack.c.l.b16 %v75
  %v412 = vunpack.c.h.b16 %v75
  %v413 = vunpack.c.l.b16 %v76
  %v414 = vunpack.c.h.b16 %v76
  %v415 = vunpack.c.l.b16 %v77
  %v416 = vunpack.c.h.b16 %v77
  %v417 = vunpack.c.l.b16 %v78
  %v418 = vunpack.c.h.b16 %v78
  %v419 = vunpack.c.l.b16 %v79
  %v420 = vunpack.c.h.b16 %v79
  %v421 = vunpack.c.l.b16 %v80
  %v422 = vunpack.c.h.b16 %v80
  %v423 = vunpack.c.l.b16 %v81
  %v424 = vunpack.c.h.b16 %v81
  %v425 = vunpack.c.l.b16 %v82
  %v426 = vunpack.c.h.b16 %v82
  %v427 = vunpack.c.l.b16 %v83
  %v428 = vunpack.c.h.b16 %v83
  %v429 = vunpack.c.l.b16 %v84
  %v430 = vunpack.c.h.b16 %v84
  %v431 = vunpack.c.l.b16 %v85
  %v432 = vunpack.c.h.b16 %v85
  %v433 = vunpack.c.l.b16 %v86
  %v434 = vunpack.c.h.b16 %v86
  %v435 = vunpack.c.l.b16 %v87
  %v436 = vunpack.c.h.b16 %v87
  %v437 = vunpack.c.l.b16 %v88
  %v438 = vunpack.c.h.b16 %v88
  %v439 = vunpack.c.l.b16 %v89
  %v440 = vunpack.c.h.b16 %v89
  %v441 = vunpack.c.l.b16 %v90
  %v442 = vunpack.c.h.b16 %v90
  %v443 = vunpack.c.l.b16 %v91
  %v444 = vunpack.c.h.b16 %v91
  %v445 = vunpack.c.l.b16 %v92
  %v446 = vunpack.c.h.b16 %v92
  %v447 = vunpack.c.l.b16 %v93
  %v448 = vunpack.c.h.b16 %v93
  %v449 = vunpack.c.l.b16 %v94
  %v450 = vunpack.c.h.b16 %v94
  %v451 = vunpack.c.l.b16 %v95
  %v452 = vunpack.c.h.b16 %v95
  %v453 = vunpack.c.l.b16 %v96
  %v454 = vunpack.c.h.b16 %v96
  %v455 = vunpack.c.l.b16 %v97
  %v456 = vunpack.c.h.b16 %v97
  %v457 = vunpack.c.l.b16 %v98
  %v458 = vunpack.c.h.b16 %v98
  %v459 = vunpack.c.l.b16 %v99
  %v460 = vunpack.c.h.b16 %v99
  %v461 = vunpack.c.l.b16 %v100
  %v462 = vunpack.c.h.b16 %v100
  %v463 = vunpack.c.l.b16 %v101
  %v464 = vunpack.c.h.b16 %v101
  %v465 = vunpack.c.l.b16 %v102
  %v466 = vunpack.c.h.b16 %v102
  %v467 = vunpack.c.l.b16 %v103
  %v468 = vunpack.c.h.b16 %v103
  %v469 = vunpack.c.l.b16 %v104
  %v470 = vunpack.c.h.b16 %v104
  %v471 = vunpack.c.l.b16 %v105
  %v472 = vunpack.c.h.b16 %v105
  %v473 = vunpack.c.l.b16 %v106
  %v474 = vunpack.c.h.b16 %v106
  %v475 = vunpack.c.l.b16 %v107
  %v476 = vunpack.c.h.b16 %v107
  %v477 = vunpack.c.l.b16 %v108
  %v478 = vunpack.c.h.b16 %v108
  %v479 = vunpack.c.l.b16 %v109
  %v480 = vunpack.c.h.b16 %v109
  %v481 = vpack.c.b16 %v397, %v383
  %v482 = vpack.c.b16 %v398, %v384
  %v483 = vpack.c.b16 %v399, %v385
  %v484 = vpack.c.b16 %v400, %v386
  %v485 = vpack.c.b16 %v401, %v387
  %v486 = vpack.c.b16 %v402, %v388
  %v487 = vpack.c.b16 %v403, %v389
  %v488 = vpack.c.b16 %v404, %v390
  %v489 = vpack.c.b16 %v405, %v391
  %v490 = vpack.c.b16 %v406, %v392
  %v491 = vpack.c.b16 %v407, %v393
  %v492 = vpack.c.b16 %v408, %v394
  %v493 = vpack.c.b16 %v409, %v395
  %v494 = vpack.c.b16 %v410, %v396
  %v495 = vpack.c.b16 %v425, %v411
  %v496 = vpack.c.b16 %v426, %v412
  %v497 = vpack.c.b16 %v427, %v413
  %v498 = vpack.c.b16 %v428, %v414
  %v499 = vpack.c.b16 %v429, %v415
  %v500 = vpack.c.b16 %v430, %v416
  %v501 = vpack.c.b16 %v431, %v417
  %v502 = vpack.c.b16 %v432, %v418
  %v503 = vpack.c.b16 %v433, %v419
  %v504 = vpack.c.b16 %v434, %v420
  %v505 = vpack.c.b16 %v435, %v421
  %v506 = vpack.c.b16 %v436, %v422
  %v507 = vpack.c.b16 %v437, %v423
  %v508 = vpack.c.b16 %v438, %v424
  %v509 = vpack.c.b16 %v453, %v439
  %v510 = vpack.c.b16 %v454, %v440
  %v511 = vpack.c.b16 %v455, %v441
  %v512 = vpack.c.b16 %v456, %v442
  %v513 = vpack.c.b16 %v457, %v443
  %v514 = vpack.c.b16 %v458, %v444
  %v515 = vpack.c.b16 %v459, %v445
  %v516 = vpack.c.b16 %v460, %v446
  %v517 = vpack.c.b16 %v461, %v447
  %v518 = vpack.c.b16 %v462, %v448
  %v519 = vpack.c.b16 %v463, %v449
  %v520 = vpack.c.b16 %v464, %v450
  %v521 = vpack.c.b16 %v465, %v451
  %v522 = vpack.c.b16 %v466, %v452
  %v523 = vpack.c.b16 %v467, %v467
  %v524 = vpack.c.b16 %v468, %v468
  %v525 = vpack.c.b16 %v469, %v469
  %v526 = vpack.c.b16 %v470, %v470
  %v527 = vpack.c.b16 %v471, %v471
  %v528 = vpack.c.b16 %v472, %v472
  %v529 = vpack.c.b16 %v473, %v473
  %v530 = vpack.c.b16 %v474, %v474
  %v531 = vpack.c.b16 %v475, %v475
  %v532 = vpack.c.b16 %v476, %v476
  %v533 = vpack.c.b16 %v477, %v477
  %v534 = vpack.c.b16 %v478, %v478
  %v535 = vpack.c.b16 %v479, %v479
  %v536 = vpack.c.b16 %v480, %v480
  %v817 = vunpack.c.l.b16 %v110
  %v818 = vunpack.c.l.b16 %v111
  %v819 = vunpack.c.l.b16 %v112
  %v820 = vunpack.c.l.b16 %v113
  %v821 = vunpack.c.l.b16 %v114
  %v822 = vunpack.c.l.b16 %v115
  %v823 = vunpack.c.l.b16 %v116
  %v824 = vunpack.c.l.b16 %v117
  %v825 = vunpack.c.l.b16 %v118
  %v826 = vunpack.c.l.b16 %v119
  %v827 = vunpack.c.l.b16 %v120
  %v828 = vunpack.c.l.b16 %v121
  %v829 = vunpack.c.l.b16 %v122
  %v830 = vunpack.c.l.b16 %v123
  %v831 = vunpack.c.l.b16 %v124
  %v832 = vunpack.c.l.b16 %v125
  %v833 = vunpack.c.l.b16 %v126
  %v834 = vunpack.c.l.b16 %v127
  %v835 = vunpack.c.l.b16 %v128
  %v836 = vunpack.c.l.b16 %v129
  %v837 = vunpack.c.l.b16 %v130
  %v838 = vunpack.c.l.b16 %v131
  %v839 = vunpack.c.l.b16 %v132
  %v840 = vunpack.c.l.b16 %v133
  %v841 = vunpack.c.l.b16 %v134
  %v842 = vunpack.c.l.b16 %v135
  %v843 = vunpack.c.l.b16 %v136
  %v844 = vunpack.c.l.b16 %v137
  %v845 = vunpack.c.l.b16 %v138
  %v846 = vunpack.c.l.b16 %v139
  %v847 = vunpack.c.l.b16 %v140
  %v848 = vunpack.c.l.b16 %v141
  %v849 = vunpack.c.l.b16 %v142
  %v850 = vunpack.c.l.b16 %v143
  %v851 = vunpack.c.l.b16 %v144
  %v852 = vunpack.c.l.b16 %v145
  %v853 = vunpack.c.l.b16 %v146
  %v854 = vunpack.c.l.b16 %v147
  %v855 = vunpack.c.l.b16 %v148
  %v856 = vunpack.c.l.b16 %v149
  %v857 = vunpack.c.l.b16 %v150
  %v858 = vunpack.c.l.b16 %v151
  %v859 = vunpack.c.l.b16 %v152
  %v860 = vunpack.c.l.b16 %v153
  %v861 = vunpack.c.l.b16 %v154
  %v862 = vunpack.c.l.b16 %v155
  %v863 = vunpack.c.l.b16 %v156
  %v864 = vunpack.c.l.b16 %v157
  %v865 = vunpack.c.l.b16 %v158
  %v866 = vunpack.c.l.b16 %v159
  %v867 = vunpack.c.l.b16 %v160
  %v868 = vunpack.c.l.b16 %v161
  %v869 = vunpack.c.l.b16 %v162
  %v870 = vunpack.c.l.b16 %v163
  %v871 = vunpack.c.l.b16 %v164
  %v872 = vunpack.c.l.b16 %v165
  %v873 = vunpack.c.l.b16 %v166
  %v874 = vunpack.c.l.b16 %v167
  %v875 = vunpack.c.l.b16 %v168
  %v876 = vunpack.c.l.b16 %v169
  %v877 = vunpack.c.l.b16 %v170
  %v878 = vunpack.c.l.b16 %v171
  %v879 = vunpack.c.l.b16 %v172
  %v880 = vunpack.c.l.b16 %v173
  %v881 = vunpack.c.l.b16 %v174
  %v882 = vunpack.c.l.b16 %v175
  %v883 = vunpack.c.l.b16 %v176
  %v884 = vunpack.c.l.b16 %v177
  %v885 = vunpack.c.l.b16 %v178
  %v886 = vunpack.c.l.b16 %v179
  %v887 = vunpack.c.l.b16 %v180
  %v888 = vunpack.c.l.b16 %v181
  %v889 = vunpack.c.l.b16 %v182
  %v890 = vunpack.c.l.b16 %v183
  %v891 = vunpack.c.l.b16 %v184
  %v892 = vunpack.c.l.b16 %v185
  %v893 = vunpack.c.l.b16 %v186
  %v894 = vunpack.c.l.b16 %v187
  %v895 = vunpack.c.l.b16 %v188
  %v896 = vunpack.c.l.b16 %v189
  %v897 = vunpack.c.l.b16 %v190
  %v898 = vunpack.c.l.b16 %v191
  %v899 = vunpack.c.l.b16 %v192
  %v900 = vunpack.c.l.b16 %v193
  %v901 = vunpack.c.l.b16 %v194
  %v902 = vunpack.c.l.b16 %v195
  %v903 = vunpack.c.l.b16 %v196
  %v904 = vunpack.c.l.b16 %v197
  %v905 = vunpack.c.l.b16 %v198
  %v906 = vunpack.c.l.b16 %v199
  %v907 = vunpack.c.l.b16 %v200
  %v908 = vunpack.c.l.b16 %v201
  %v909 = vunpack.c.l.b16 %v202
  %v910 = vunpack.c.l.b16 %v203
  %v911 = vunpack.c.l.b16 %v204
  %v912 = vunpack.c.l.b16 %v205
  %v913 = vunpack.c.l.b16 %v206
  %v914 = vunpack.c.l.b16 %v207
  %v915 = vunpack.c.l.b16 %v208
  %v916 = vunpack.c.l.b16 %v209
  %v917 = vunpack.c.l.b16 %v210
  %v918 = vunpack.c.l.b16 %v211
  %v919 = vunpack.c.l.b16 %v212
  %v920 = vunpack.c.l.b16 %v213
  %v921 = vunpack.c.l.b16 %v214
  %v922 = vunpack.c.l.b16 %v215
  %v923 = vunpack.c.l.b16 %v216
  %v924 = vunpack.c.l.b16 %v217
  %v925 = vunpack.c.l.b16 %v218
  %v926 = vunpack.c.l.b16 %v219
  %v927 = vunpack.c.l.b16 %v220
  %v928 = vunpack.c.l.b16 %v221
  %v929 = vunpack.c.l.b16 %v222
  %v930 = vunpack.c.l.b16 %v223
  %v931 = vunpack.c.l.b16 %v224
  %v932 = vunpack.c.l.b16 %v225
  %v933 = vunpack.c.l.b16 %v226
  %v934 = vunpack.c.l.b16 %v227
  %v935 = vunpack.c.l.b16 %v228
  %v936 = vunpack.c.l.b16 %v229
  %v937 = vunpack.c.l.b16 %v230
  %v938 = vunpack.c.l.b16 %v231
  %v939 = vunpack.c.l.b16 %v232
  %v940 = vunpack.c.l.b16 %v233
  %v941 = vunpack.c.l.b16 %v234
  %v942 = vunpack.c.l.b16 %v235
  %v943 = vunpack.c.l.b16 %v236
  %v944 = vunpack.c.l.b16 %v237
  %v945 = vunpack.c.l.b16 %v238
  %v946 = vunpack.c.l.b16 %v239
  %v947 = vunpack.c.l.b16 %v240
  %v948 = vunpack.c.l.b16 %v241
  %v949 = vunpack.c.l.b16 %v242
  %v950 = vunpack.c.l.b16 %v243
  %v951 = vunpack.c.l.b16 %v244
  %v952 = vunpack.c.l.b16 %v245
  %v953 = vunpack.c.l.b16 %v246
  %v954 = vunpack.c.l.b16 %v247
  %v955 = vunpack.c.l.b16 %v248
  %v956 = vunpack.c.l.b16 %v249
  %v957 = vunpack.c.l.b16 %v250
  %v958 = vunpack.c.l.b16 %v251
  %v959 = vunpack.c.l.b16 %v252
  %v960 = vunpack.c.l.b16 %v253
  %v961 = vunpack.c.l.b16 %v254
  %v962 = vunpack.c.l.b16 %v255
  %v963 = vunpack.c.l.b16 %v256
  %v964 = vunpack.c.l.b16 %v257
  %v965 = vunpack.c.l.b16 %v258
  %v966 = vunpack.c.l.b16 %v259
  %v967 = vunpack.c.l.b16 %v260
  %v968 = vunpack.c.l.b16 %v261
  %v969 = vunpack.c.l.b16 %v262
  %v970 = vunpack.c.l.b16 %v263
  %v971 = vunpack.c.l.b16 %v264
  %v972 = vunpack.c.l.b16 %v265
  %v973 = vunpack.c.l.b16 %v266
  %v974 = vunpack.c.l.b16 %v267
  %v975 = vunpack.c.l.b16 %v268
  %v976 = vunpack.c.l.b16 %v269
  %v977 = vunpack.c.l.b16 %v270
  %v978 = vunpack.c.l.b16 %v271
  %v979 = vunpack.c.l.b16 %v272
  %v980 = vunpack.c.l.b16 %v273
  %v981 = vunpack.c.l.b16 %v274
  %v982 = vunpack.c.l.b16 %v275
  %v983 = vunpack.c.l.b16 %v276
  %v984 = vunpack.c.l.b16 %v277
  %v985 = vunpack.c.l.b16 %v278
  %v986 = vunpack.c.l.b16 %v279
  %v987 = vunpack.c.l.b16 %v280
  %v988 = vunpack.c.l.b16 %v281
  %v989 = vunpack.c.l.b16 %v282
  %v990 = vunpack.c.l.b16 %v283
  %v991 = vunpack.c.l.b16 %v284
  %v992 = vunpack.c.l.b16 %v285
  %v993 = vunpack.c.l.b16 %v286
  %v994 = vunpack.c.l.b16 %v287
  %v995 = vunpack.c.l.b16 %v288
  %v996 = vunpack.c.l.b16 %v289
  %v997 = vunpack.c.l.b16 %v290
  %v998 = vunpack.c.l.b16 %v291
  %v999 = vunpack.c.l.b16 %v292
  %v1000 = vunpack.c.l.b16 %v293
  %v1001 = vunpack.c.l.b16 %v294
  %v1002 = vunpack.c.l.b16 %v295
  %v1003 = vunpack.c.l.b16 %v296
  %v1004 = vunpack.c.l.b16 %v297
  %v1005 = vunpack.c.l.b16 %v298
  %v1006 = vunpack.c.l.b16 %v299
  %v1007 = vunpack.c.l.b16 %v300
  %v1008 = vunpack.c.l.b16 %v301
  %v1009 = vunpack.c.l.b16 %v302
  %v1010 = vunpack.c.l.b16 %v303
  %v1011 = vunpack.c.l.b16 %v304
  %v1012 = vunpack.c.l.b16 %v305
  %v1013 = vunpack.c.l.b16 %v306
  %v1014 = vunpack.c.l.b16 %v307
  %v1015 = vunpack.c.l.b16 %v308
  %v1016 = vunpack.c.l.b16 %v309
  %v1017 = vunpack.c.l.b16 %v310
  %v1018 = vunpack.c.l.b16 %v311
  %v1019 = vunpack.c.l.b16 %v312
  %v1020 = vunpack.c.l.b16 %v313
  %v1021 = vunpack.c.l.b16 %v314
  %v1022 = vunpack.c.l.b16 %v315
  %v1023 = vunpack.c.l.b16 %v316
  %v1024 = vunpack.c.l.b16 %v317
  %v1025 = vunpack.c.l.b16 %v318
  %v1026 = vunpack.c.l.b16 %v319
  %v1027 = vunpack.c.l.b16 %v320
  %v1028 = vunpack.c.l.b16 %v321
  %v1029 = vunpack.c.l.b16 %v322
  %v1030 = vunpack.c.l.b16 %v323
  %v1031 = vunpack.c.l.b16 %v324
  %v1032 = vunpack.c.l.b16 %v325
  %v1033 = vunpack.c.l.b16 %v326
  %v1034 = vunpack.c.l.b16 %v327
  %v1035 = vunpack.c.l.b16 %v328
  %v1036 = vunpack.c.l.b16 %v329
  %v1037 = vunpack.c.l.b16 %v330
  %v1038 = vunpack.c.l.b16 %v331
  %v1039 = vunpack.c.l.b16 %v332
  %v1040 = vunpack.c.l.b16 %v333
  %v1041 = vpack.c.b16 %v818, %v817
  %v1042 = vpack.c.b16 %v820, %v819
  %v1043 = vpack.c.b16 %v822, %v821
  %v1044 = vpack.c.b16 %v824, %v823
  %v1045 = vpack.c.b16 %v826, %v825
  %v1046 = vpack.c.b16 %v828, %v827
  %v1047 = vpack.c.b16 %v830, %v829
  %v1048 = vpack.c.b16 %v832, %v831
  %v1049 = vpack.c.b16 %v834, %v833
  %v1050 = vpack.c.b16 %v836, %v835
  %v1051 = vpack.c.b16 %v838, %v837
  %v1052 = vpack.c.b16 %v840, %v839
  %v1053 = vpack.c.b16 %v842, %v841
  %v1054 = vpack.c.b16 %v844, %v843
  %v1055 = vpack.c.b16 %v846, %v845
  %v1056 = vpack.c.b16 %v848, %v847
  %v1057 = vpack.c.b16 %v850, %v849
  %v1058 = vpack.c.b16 %v852, %v851
  %v1059 = vpack.c.b16 %v854, %v853
  %v1060 = vpack.c.b16 %v856, %v855
  %v1061 = vpack.c.b16 %v858, %v857
  %v1062 = vpack.c.b16 %v860, %v859
  %v1063 = vpack.c.b16 %v862, %v861
  %v1064 = vpack.c.b16 %v864, %v863
  %v1065 = vpack.c.b16 %v866, %v865
  %v1066 = vpack.c.b16 %v868, %v867
  %v1067 = vpack.c.b16 %v870, %v869
  %v1068 = vpack.c.b16 %v872, %v871
  %v1069 = vpack.c.b16 %v874, %v873
  %v1070 = vpack.c.b16 %v876, %v875
  %v1071 = vpack.c.b16 %v878, %v877
  %v1072 = vpack.c.b16 %v880, %v879
  %v1073 = vpack.c.b16 %v882, %v881
  %v1074 = vpack.c.b16 %v884, %v883
  %v1075 = vpack.c.b16 %v886, %v885
  %v1076 = vpack.c.b16 %v888, %v887
  %v1077 = vpack.c.b16 %v890, %v889
  %v1078 = vpack.c.b16 %v892, %v891
  %v1079 = vpack.c.b16 %v894, %v893
  %v1080 = vpack.c.b16 %v896, %v895
  %v1081 = vpack.c.b16 %v898, %v897
  %v1082 = vpack.c.b16 %v900, %v899
  %v1083 = vpack.c.b16 %v902, %v901
  %v1084 = vpack.c.b16 %v904, %v903
  %v1085 = vpack.c.b16 %v906, %v905
  %v1086 = vpack.c.b16 %v908, %v907
  %v1087 = vpack.c.b16 %v910, %v909
  %v1088 = vpack.c.b16 %v912, %v911
  %v1089 = vpack.c.b16 %v914, %v913
  %v1090 = vpack.c.b16 %v916, %v915
  %v1091 = vpack.c.b16 %v918, %v917
  %v1092 = vpack.c.b16 %v920, %v919
  %v1093 = vpack.c.b16 %v922, %v921
  %v1094 = vpack.c.b16 %v924, %v923
  %v1095 = vpack.c.b16 %v926, %v925
  %v1096 = vpack.c.b16 %v928, %v927
  %v1097 = vpack.c.b16 %v930, %v929
  %v1098 = vpack.c.b16 %v932, %v931
  %v1099 = vpack.c.b16 %v934, %v933
  %v1100 = vpack.c.b16 %v936, %v935
  %v1101 = vpack.c.b16 %v938, %v937
  %v1102 = vpack.c.b16 %v940, %v939
  %v1103 = vpack.c.b16 %v942, %v941
  %v1104 = vpack.c.b16 %v944, %v943
  %v1105 = vpack.c.b16 %v946, %v945
  %v1106 = vpack.c.b16 %v948, %v947
  %v1107 = vpack.c.b16 %v950, %v949
  %v1108 = vpack.c.b16 %v952, %v951
  %v1109 = vpack.c.b16 %v954, %v953
  %v1110 = vpack.c.b16 %v956, %v955
  %v1111 = vpack.c.b16 %v958, %v957
  %v1112 = vpack.c.b16 %v960, %v959
  %v1113 = vpack.c.b16 %v962, %v961
  %v1114 = vpack.c.b16 %v964, %v963
  %v1115 = vpack.c.b16 %v966, %v965
  %v1116 = vpack.c.b16 %v968, %v967
  %v1117 = vpack.c.b16 %v970, %v969
  %v1118 = vpack.c.b16 %v972, %v971
  %v1119 = vpack.c.b16 %v974, %v973
  %v1120 = vpack.c.b16 %v976, %v975
  %v1121 = vpack.c.b16 %v978, %v977
  %v1122 = vpack.c.b16 %v980, %v979
  %v1123 = vpack.c.b16 %v982, %v981
  %v1124 = vpack.c.b16 %v984, %v983
  %v1125 = vpack.c.b16 %v986, %v985
  %v1126 = vpack.c.b16 %v988, %v987
  %v1127 = vpack.c.b16 %v990, %v989
  %v1128 = vpack.c.b16 %v992, %v991
  %v1129 = vpack.c.b16 %v994, %v993
  %v1130 = vpack.c.b16 %v996, %v995
  %v1131 = vpack.c.b16 %v998, %v997
  %v1132 = vpack.c.b16 %v1000, %v999
  %v1133 = vpack.c.b16 %v1002, %v1001
  %v1134 = vpack.c.b16 %v1004, %v1003
  %v1135 = vpack.c.b16 %v1006, %v1005
  %v1136 = vpack.c.b16 %v1008, %v1007
  %v1137 = vpack.c.b16 %v1010, %v1009
  %v1138 = vpack.c.b16 %v1012, %v1011
  %v1139 = vpack.c.b16 %v1014, %v1013
  %v1140 = vpack.c.b16 %v1016, %v1015
  %v1141 = vpack.c.b16 %v1018, %v1017
  %v1142 = vpack.c.b16 %v1020, %v1019
  %v1143 = vpack.c.b16 %v1022, %v1021
  %v1144 = vpack.c.b16 %v1024, %v1023
  %v1145 = vpack.c.b16 %v1026, %v1025
  %v1146 = vpack.c.b16 %v1028, %v1027
  %v1147 = vpack.c.b16 %v1030, %v1029
  %v1148 = vpack.c.b16 %v1032, %v1031
  %v1149 = vpack.c.b16 %v1034, %v1033
  %v1150 = vpack.c.b16 %v1036, %v1035
  %v1151 = vpack.c.b16 %v1038, %v1037
  %v1152 = vpack.c.b16 %v1040, %v1039
  %1265 = vmatprep.subr.bf16.mxu0 0
  %1266 = vmatpush1.bf16.msra.mxu0 %v1041
  %1267 = vmatprep.subr.bf16.mxu0 0
  %1268 = vmatpush1.bf16.msra.mxu0 %v1042
  %1269 = vmatprep.subr.bf16.mxu0 0
  %1270 = vmatpush1.bf16.msra.mxu0 %v1043
  %1271 = vmatprep.subr.bf16.mxu0 0
  %1272 = vmatpush1.bf16.msra.mxu0 %v1044
  %1273 = vmatprep.subr.bf16.mxu0 0
  %1274 = vmatpush1.bf16.msra.mxu0 %v1045
  %1275 = vmatprep.subr.bf16.mxu0 0
  %1276 = vmatpush1.bf16.msra.mxu0 %v1046
  %1277 = vmatprep.subr.bf16.mxu0 0
  %1278 = vmatpush1.bf16.msra.mxu0 %v1047
  %1279 = vmatprep.subr.bf16.mxu0 0
  %1280 = vmatpush1.bf16.msra.mxu0 %v1048
  %1281 = vmatprep.subr.bf16.mxu0 0
  %1282 = vmatpush1.bf16.msra.mxu0 %v1049
  %1283 = vmatprep.subr.bf16.mxu0 0
  %1284 = vmatpush1.bf16.msra.mxu0 %v1050
  %1285 = vmatprep.subr.bf16.mxu0 0
  %1286 = vmatpush1.bf16.msra.mxu0 %v1051
  %1287 = vmatprep.subr.bf16.mxu0 0
  %1288 = vmatpush1.bf16.msra.mxu0 %v1052
  %1289 = vmatprep.subr.bf16.mxu0 0
  %1290 = vmatpush1.bf16.msra.mxu0 %v1053
  %1291 = vmatprep.subr.bf16.mxu0 0
  %1292 = vmatpush1.bf16.msra.mxu0 %v1054
  %1293 = vmatprep.subr.bf16.mxu0 0
  %1294 = vmatpush1.bf16.msra.mxu0 %v1055
  %1295 = vmatprep.subr.bf16.mxu0 0
  %1296 = vmatpush1.bf16.msra.mxu0 %v1056
  %1297 = vmatprep.mubr.bf16.mxu0 %v482
  %1298 = vmatmul.mubr.bf16.gmra.mrb[0].mxu0 %v481
  %v1299 = vpop.f32.mrb[0].mxu0
  %v1300 = vadd.f32 0.0, %v1299
  %v1301 = vpop.f32.mrb[0].mxu0
  %v1302 = vpop.f32.mrb[0].mxu0
  %v1303 = vadd.f32 0.0, %v1302
  %v1304 = vpop.f32.mrb[0].mxu0
  %1305 = vmatprep.mubr.bf16.mxu0 %v496
  %1306 = vmatmul.mubr.bf16.gmra.mrb[0].mxu0 %v495
  %v1307 = vpop.f32.mrb[0].mxu0
  %v1308 = vadd.f32 0.0, %v1307
  %v1309 = vpop.f32.mrb[0].mxu0
  %v1310 = vpop.f32.mrb[0].mxu0
  %v1311 = vadd.f32 0.0, %v1310
  %v1312 = vpop.f32.mrb[0].mxu0
  %1313 = vmatprep.mubr.bf16.mxu0 %v510
  %1314 = vmatmul.mubr.bf16.gmra.mrb[0].mxu0 %v509
  %v1315 = vpop.f32.mrb[0].mxu0
  %v1316 = vadd.f32 0.0, %v1315
  %v1317 = vpop.f32.mrb[0].mxu0
  %v1318 = vpop.f32.mrb[0].mxu0
  %v1319 = vadd.f32 0.0, %v1318
  %v1320 = vpop.f32.mrb[0].mxu0
  %1321 = vmatprep.mubr.bf16.mxu0 %v524
  %1322 = vmatmul.mubr.bf16.gmra.mrb[0].mxu0 %v523
  %v1323 = vpop.f32.mrb[0].mxu0
  %v1324 = vadd.f32 0.0, %v1323
  %v1325 = vpop.f32.mrb[0].mxu0
  %v1326 = vpop.f32.mrb[0].mxu0
  %v1327 = vpop.f32.mrb[0].mxu0
  %1328 = vdwg.mxu0
  %1329 = vmatprep.subr.bf16.mxu0 0
  %1330 = vmatpush1.bf16.msra.mxu0 %v1057
  %1331 = vmatprep.subr.bf16.mxu0 0
  %1332 = vmatpush1.bf16.msra.mxu0 %v1058
  %1333 = vmatprep.subr.bf16.mxu0 0
  %1334 = vmatpush1.bf16.msra.mxu0 %v1059
  %1335 = vmatprep.subr.bf16.mxu0 0
  %1336 = vmatpush1.bf16.msra.mxu0 %v1060
  %1337 = vmatprep.subr.bf16.mxu0 0
  %1338 = vmatpush1.bf16.msra.mxu0 %v1061
  %1339 = vmatprep.subr.bf16.mxu0 0
  %1340 = vmatpush1.bf16.msra.mxu0 %v1062
  %1341 = vmatprep.subr.bf16.mxu0 0
  %1342 = vmatpush1.bf16.msra.mxu0 %v1063
  %1343 = vmatprep.subr.bf16.mxu0 0
  %1344 = vmatpush1.bf16.msra.mxu0 %v1064
  %1345 = vmatprep.subr.bf16.mxu0 0
  %1346 = vmatpush1.bf16.msra.mxu0 %v1065
  %1347 = vmatprep.subr.bf16.mxu0 0
  %1348 = vmatpush1.bf16.msra.mxu0 %v1066
  %1349 = vmatprep.subr.bf16.mxu0 0
  %1350 = vmatpush1.bf16.msra.mxu0 %v1067
  %1351 = vmatprep.subr.bf16.mxu0 0
  %1352 = vmatpush1.bf16.msra.mxu0 %v1068
  %1353 = vmatprep.subr.bf16.mxu0 0
  %1354 = vmatpush1.bf16.msra.mxu0 %v1069
  %1355 = vmatprep.subr.bf16.mxu0 0
  %1356 = vmatpush1.bf16.msra.mxu0 %v1070
  %1357 = vmatprep.subr.bf16.mxu0 0
  %1358 = vmatpush1.bf16.msra.mxu0 %v1071
  %1359 = vmatprep.subr.bf16.mxu0 0
  %1360 = vmatpush1.bf16.msra.mxu0 %v1072
  %1361 = vmatprep.mubr.bf16.mxu0 %v484
  %1362 = vmatmul.mubr.bf16.gmra.mrb[0].mxu0 %v483
  %v1363 = vpop.f32.mrb[0].mxu0
  %v1364 = vadd.f32 %v1300, %v1363
  %v1365 = vpop.f32.mrb[0].mxu0
  %v1366 = vpop.f32.mrb[0].mxu0
  %v1367 = vadd.f32 %v1303, %v1366
  %v1368 = vpop.f32.mrb[0].mxu0
  %1369 = vmatprep.mubr.bf16.mxu0 %v498
  %1370 = vmatmul.mubr.bf16.gmra.mrb[0].mxu0 %v497
  %v1371 = vpop.f32.mrb[0].mxu0
  %v1372 = vadd.f32 %v1308, %v1371
  %v1373 = vpop.f32.mrb[0].mxu0
  %v1374 = vpop.f32.mrb[0].mxu0
  %v1375 = vadd.f32 %v1311, %v1374
  %v1376 = vpop.f32.mrb[0].mxu0
  %1377 = vmatprep.mubr.bf16.mxu0 %v512
  %1378 = vmatmul.mubr.bf16.gmra.mrb[0].mxu0 %v511
  %v1379 = vpop.f32.mrb[0].mxu0
  %v1380 = vadd.f32 %v1316, %v1379
  %v1381 = vpop.f32.mrb[0].mxu0
  %v1382 = vpop.f32.mrb[0].mxu0
  %v1383 = vadd.f32 %v1319, %v1382
  %v1384 = vpop.f32.mrb[0].mxu0
  %1385 = vmatprep.mubr.bf16.mxu0 %v526
  %1386 = vmatmul.mubr.bf16.gmra.mrb[0].mxu0 %v525
  %v1387 = vpop.f32.mrb[0].mxu0
  %v1388 = vadd.f32 %v1324, %v1387
  %v1389 = vpop.f32.mrb[0].mxu0
  %v1390 = vpop.f32.mrb[0].mxu0
  %v1391 = vpop.f32.mrb[0].mxu0
  %1392 = vdwg.mxu0
  %1393 = vmatprep.subr.bf16.mxu0 0
  %1394 = vmatpush1.bf16.msra.mxu0 %v1073
  %1395 = vmatprep.subr.bf16.mxu0 0
  %1396 = vmatpush1.bf16.msra.mxu0 %v1074
  %1397 = vmatprep.subr.bf16.mxu0 0
  %1398 = vmatpush1.bf16.msra.mxu0 %v1075
  %1399 = vmatprep.subr.bf16.mxu0 0
  %1400 = vmatpush1.bf16.msra.mxu0 %v1076
  %1401 = vmatprep.subr.bf16.mxu0 0
  %1402 = vmatpush1.bf16.msra.mxu0 %v1077
  %1403 = vmatprep.subr.bf16.mxu0 0
  %1404 = vmatpush1.bf16.msra.mxu0 %v1078
  %1405 = vmatprep.subr.bf16.mxu0 0
  %1406 = vmatpush1.bf16.msra.mxu0 %v1079
  %1407 = vmatprep.subr.bf16.mxu0 0
  %1408 = vmatpush1.bf16.msra.mxu0 %v1080
  %1409 = vmatprep.subr.bf16.mxu0 0
  %1410 = vmatpush1.bf16.msra.mxu0 %v1081
  %1411 = vmatprep.subr.bf16.mxu0 0
  %1412 = vmatpush1.bf16.msra.mxu0 %v1082
  %1413 = vmatprep.subr.bf16.mxu0 0
  %1414 = vmatpush1.bf16.msra.mxu0 %v1083
  %1415 = vmatprep.subr.bf16.mxu0 0
  %1416 = vmatpush1.bf16.msra.mxu0 %v1084
  %1417 = vmatprep.subr.bf16.mxu0 0
  %1418 = vmatpush1.bf16.msra.mxu0 %v1085
  %1419 = vmatprep.subr.bf16.mxu0 0
  %1420 = vmatpush1.bf16.msra.mxu0 %v1086
  %1421 = vmatprep.subr.bf16.mxu0 0
  %1422 = vmatpush1.bf16.msra.mxu0 %v1087
  %1423 = vmatprep.subr.bf16.mxu0 0
  %1424 = vmatpush1.bf16.msra.mxu0 %v1088
  %1425 = vmatprep.mubr.bf16.mxu0 %v486
  %1426 = vmatmul.mubr.bf16.gmra.mrb[0].mxu0 %v485
  %v1427 = vpop.f32.mrb[0].mxu0
  %v1428 = vadd.f32 %v1364, %v1427
  %v1429 = vpop.f32.mrb[0].mxu0
  %v1430 = vpop.f32.mrb[0].mxu0
  %v1431 = vadd.f32 %v1367, %v1430
  %v1432 = vpop.f32.mrb[0].mxu0
  %1433 = vmatprep.mubr.bf16.mxu0 %v500
  %1434 = vmatmul.mubr.bf16.gmra.mrb[0].mxu0 %v499
  %v1435 = vpop.f32.mrb[0].mxu0
  %v1436 = vadd.f32 %v1372, %v1435
  %v1437 = vpop.f32.mrb[0].mxu0
  %v1438 = vpop.f32.mrb[0].mxu0
  %v1439 = vadd.f32 %v1375, %v1438
  %v1440 = vpop.f32.mrb[0].mxu0
  %1441 = vmatprep.mubr.bf16.mxu0 %v514
  %1442 = vmatmul.mubr.bf16.gmra.mrb[0].mxu0 %v513
  %v1443 = vpop.f32.mrb[0].mxu0
  %v1444 = vadd.f32 %v1380, %v1443
  %v1445 = vpop.f32.mrb[0].mxu0
  %v1446 = vpop.f32.mrb[0].mxu0
  %v1447 = vadd.f32 %v1383, %v1446
  %v1448 = vpop.f32.mrb[0].mxu0
  %1449 = vmatprep.mubr.bf16.mxu0 %v528
  %1450 = vmatmul.mubr.bf16.gmra.mrb[0].mxu0 %v527
  %v1451 = vpop.f32.mrb[0].mxu0
  %v1452 = vadd.f32 %v1388, %v1451
  %v1453 = vpop.f32.mrb[0].mxu0
  %v1454 = vpop.f32.mrb[0].mxu0
  %v1455 = vpop.f32.mrb[0].mxu0
  %1456 = vdwg.mxu0
  %1457 = vmatprep.subr.bf16.mxu0 0
  %1458 = vmatpush1.bf16.msra.mxu0 %v1089
  %1459 = vmatprep.subr.bf16.mxu0 0
  %1460 = vmatpush1.bf16.msra.mxu0 %v1090
  %1461 = vmatprep.subr.bf16.mxu0 0
  %1462 = vmatpush1.bf16.msra.mxu0 %v1091
  %1463 = vmatprep.subr.bf16.mxu0 0
  %1464 = vmatpush1.bf16.msra.mxu0 %v1092
  %1465 = vmatprep.subr.bf16.mxu0 0
  %1466 = vmatpush1.bf16.msra.mxu0 %v1093
  %1467 = vmatprep.subr.bf16.mxu0 0
  %1468 = vmatpush1.bf16.msra.mxu0 %v1094
  %1469 = vmatprep.subr.bf16.mxu0 0
  %1470 = vmatpush1.bf16.msra.mxu0 %v1095
  %1471 = vmatprep.subr.bf16.mxu0 0
  %1472 = vmatpush1.bf16.msra.mxu0 %v1096
  %1473 = vmatprep.subr.bf16.mxu0 0
  %1474 = vmatpush1.bf16.msra.mxu0 %v1097
  %1475 = vmatprep.subr.bf16.mxu0 0
  %1476 = vmatpush1.bf16.msra.mxu0 %v1098
  %1477 = vmatprep.subr.bf16.mxu0 0
  %1478 = vmatpush1.bf16.msra.mxu0 %v1099
  %1479 = vmatprep.subr.bf16.mxu0 0
  %1480 = vmatpush1.bf16.msra.mxu0 %v1100
  %1481 = vmatprep.subr.bf16.mxu0 0
  %1482 = vmatpush1.bf16.msra.mxu0 %v1101
  %1483 = vmatprep.subr.bf16.mxu0 0
  %1484 = vmatpush1.bf16.msra.mxu0 %v1102
  %1485 = vmatprep.subr.bf16.mxu0 0
  %1486 = vmatpush1.bf16.msra.mxu0 %v1103
  %1487 = vmatprep.subr.bf16.mxu0 0
  %1488 = vmatpush1.bf16.msra.mxu0 %v1104
  %1489 = vmatprep.mubr.bf16.mxu0 %v488
  %1490 = vmatmul.mubr.bf16.gmra.mrb[0].mxu0 %v487
  %v1491 = vpop.f32.mrb[0].mxu0
  %v1492 = vadd.f32 %v1428, %v1491
  %v1493 = vpop.f32.mrb[0].mxu0
  %v1494 = vpop.f32.mrb[0].mxu0
  %v1495 = vadd.f32 %v1431, %v1494
  %v1496 = vpop.f32.mrb[0].mxu0
  %1497 = vmatprep.mubr.bf16.mxu0 %v502
  %1498 = vmatmul.mubr.bf16.gmra.mrb[0].mxu0 %v501
  %v1499 = vpop.f32.mrb[0].mxu0
  %v1500 = vadd.f32 %v1436, %v1499
  %v1501 = vpop.f32.mrb[0].mxu0
  %v1502 = vpop.f32.mrb[0].mxu0
  %v1503 = vadd.f32 %v1439, %v1502
  %v1504 = vpop.f32.mrb[0].mxu0
  %1505 = vmatprep.mubr.bf16.mxu0 %v516
  %1506 = vmatmul.mubr.bf16.gmra.mrb[0].mxu0 %v515
  %v1507 = vpop.f32.mrb[0].mxu0
  %v1508 = vadd.f32 %v1444, %v1507
  %v1509 = vpop.f32.mrb[0].mxu0
  %v1510 = vpop.f32.mrb[0].mxu0
  %v1511 = vadd.f32 %v1447, %v1510
  %v1512 = vpop.f32.mrb[0].mxu0
  %1513 = vmatprep.mubr.bf16.mxu0 %v530
  %1514 = vmatmul.mubr.bf16.gmra.mrb[0].mxu0 %v529
  %v1515 = vpop.f32.mrb[0].mxu0
  %v1516 = vadd.f32 %v1452, %v1515
  %v1517 = vpop.f32.mrb[0].mxu0
  %v1518 = vpop.f32.mrb[0].mxu0
  %v1519 = vpop.f32.mrb[0].mxu0
  %1520 = vdwg.mxu0
  %1521 = vmatprep.subr.bf16.mxu0 0
  %1522 = vmatpush1.bf16.msra.mxu0 %v1105
  %1523 = vmatprep.subr.bf16.mxu0 0
  %1524 = vmatpush1.bf16.msra.mxu0 %v1106
  %1525 = vmatprep.subr.bf16.mxu0 0
  %1526 = vmatpush1.bf16.msra.mxu0 %v1107
  %1527 = vmatprep.subr.bf16.mxu0 0
  %1528 = vmatpush1.bf16.msra.mxu0 %v1108
  %1529 = vmatprep.subr.bf16.mxu0 0
  %1530 = vmatpush1.bf16.msra.mxu0 %v1109
  %1531 = vmatprep.subr.bf16.mxu0 0
  %1532 = vmatpush1.bf16.msra.mxu0 %v1110
  %1533 = vmatprep.subr.bf16.mxu0 0
  %1534 = vmatpush1.bf16.msra.mxu0 %v1111
  %1535 = vmatprep.subr.bf16.mxu0 0
  %1536 = vmatpush1.bf16.msra.mxu0 %v1112
  %1537 = vmatprep.subr.bf16.mxu0 0
  %1538 = vmatpush1.bf16.msra.mxu0 %v1113
  %1539 = vmatprep.subr.bf16.mxu0 0
  %1540 = vmatpush1.bf16.msra.mxu0 %v1114
  %1541 = vmatprep.subr.bf16.mxu0 0
  %1542 = vmatpush1.bf16.msra.mxu0 %v1115
  %1543 = vmatprep.subr.bf16.mxu0 0
  %1544 = vmatpush1.bf16.msra.mxu0 %v1116
  %1545 = vmatprep.subr.bf16.mxu0 0
  %1546 = vmatpush1.bf16.msra.mxu0 %v1117
  %1547 = vmatprep.subr.bf16.mxu0 0
  %1548 = vmatpush1.bf16.msra.mxu0 %v1118
  %1549 = vmatprep.subr.bf16.mxu0 0
  %1550 = vmatpush1.bf16.msra.mxu0 %v1119
  %1551 = vmatprep.subr.bf16.mxu0 0
  %1552 = vmatpush1.bf16.msra.mxu0 %v1120
  %1553 = vmatprep.mubr.bf16.mxu0 %v490
  %1554 = vmatmul.mubr.bf16.gmra.mrb[0].mxu0 %v489
  %v1555 = vpop.f32.mrb[0].mxu0
  %v1556 = vadd.f32 %v1492, %v1555
  %v1557 = vpop.f32.mrb[0].mxu0
  %v1558 = vpop.f32.mrb[0].mxu0
  %v1559 = vadd.f32 %v1495, %v1558
  %v1560 = vpop.f32.mrb[0].mxu0
  %1561 = vmatprep.mubr.bf16.mxu0 %v504
  %1562 = vmatmul.mubr.bf16.gmra.mrb[0].mxu0 %v503
  %v1563 = vpop.f32.mrb[0].mxu0
  %v1564 = vadd.f32 %v1500, %v1563
  %v1565 = vpop.f32.mrb[0].mxu0
  %v1566 = vpop.f32.mrb[0].mxu0
  %v1567 = vadd.f32 %v1503, %v1566
  %v1568 = vpop.f32.mrb[0].mxu0
  %1569 = vmatprep.mubr.bf16.mxu0 %v518
  %1570 = vmatmul.mubr.bf16.gmra.mrb[0].mxu0 %v517
  %v1571 = vpop.f32.mrb[0].mxu0
  %v1572 = vadd.f32 %v1508, %v1571
  %v1573 = vpop.f32.mrb[0].mxu0
  %v1574 = vpop.f32.mrb[0].mxu0
  %v1575 = vadd.f32 %v1511, %v1574
  %v1576 = vpop.f32.mrb[0].mxu0
  %1577 = vmatprep.mubr.bf16.mxu0 %v532
  %1578 = vmatmul.mubr.bf16.gmra.mrb[0].mxu0 %v531
  %v1579 = vpop.f32.mrb[0].mxu0
  %v1580 = vadd.f32 %v1516, %v1579
  %v1581 = vpop.f32.mrb[0].mxu0
  %v1582 = vpop.f32.mrb[0].mxu0
  %v1583 = vpop.f32.mrb[0].mxu0
  %1584 = vdwg.mxu0
  %1585 = vmatprep.subr.bf16.mxu0 0
  %1586 = vmatpush1.bf16.msra.mxu0 %v1121
  %1587 = vmatprep.subr.bf16.mxu0 0
  %1588 = vmatpush1.bf16.msra.mxu0 %v1122
  %1589 = vmatprep.subr.bf16.mxu0 0
  %1590 = vmatpush1.bf16.msra.mxu0 %v1123
  %1591 = vmatprep.subr.bf16.mxu0 0
  %1592 = vmatpush1.bf16.msra.mxu0 %v1124
  %1593 = vmatprep.subr.bf16.mxu0 0
  %1594 = vmatpush1.bf16.msra.mxu0 %v1125
  %1595 = vmatprep.subr.bf16.mxu0 0
  %1596 = vmatpush1.bf16.msra.mxu0 %v1126
  %1597 = vmatprep.subr.bf16.mxu0 0
  %1598 = vmatpush1.bf16.msra.mxu0 %v1127
  %1599 = vmatprep.subr.bf16.mxu0 0
  %1600 = vmatpush1.bf16.msra.mxu0 %v1128
  %1601 = vmatprep.subr.bf16.mxu0 0
  %1602 = vmatpush1.bf16.msra.mxu0 %v1129
  %1603 = vmatprep.subr.bf16.mxu0 0
  %1604 = vmatpush1.bf16.msra.mxu0 %v1130
  %1605 = vmatprep.subr.bf16.mxu0 0
  %1606 = vmatpush1.bf16.msra.mxu0 %v1131
  %1607 = vmatprep.subr.bf16.mxu0 0
  %1608 = vmatpush1.bf16.msra.mxu0 %v1132
  %1609 = vmatprep.subr.bf16.mxu0 0
  %1610 = vmatpush1.bf16.msra.mxu0 %v1133
  %1611 = vmatprep.subr.bf16.mxu0 0
  %1612 = vmatpush1.bf16.msra.mxu0 %v1134
  %1613 = vmatprep.subr.bf16.mxu0 0
  %1614 = vmatpush1.bf16.msra.mxu0 %v1135
  %1615 = vmatprep.subr.bf16.mxu0 0
  %1616 = vmatpush1.bf16.msra.mxu0 %v1136
  %1617 = vmatprep.mubr.bf16.mxu0 %v492
  %1618 = vmatmul.mubr.bf16.gmra.mrb[0].mxu0 %v491
  %v1619 = vpop.f32.mrb[0].mxu0
  %v1620 = vadd.f32 %v1556, %v1619
  %v1621 = vpop.f32.mrb[0].mxu0
  %v1622 = vpop.f32.mrb[0].mxu0
  %v1623 = vadd.f32 %v1559, %v1622
  %v1624 = vpop.f32.mrb[0].mxu0
  %1625 = vmatprep.mubr.bf16.mxu0 %v506
  %1626 = vmatmul.mubr.bf16.gmra.mrb[0].mxu0 %v505
  %v1627 = vpop.f32.mrb[0].mxu0
  %v1628 = vadd.f32 %v1564, %v1627
  %v1629 = vpop.f32.mrb[0].mxu0
  %v1630 = vpop.f32.mrb[0].mxu0
  %v1631 = vadd.f32 %v1567, %v1630
  %v1632 = vpop.f32.mrb[0].mxu0
  %1633 = vmatprep.mubr.bf16.mxu0 %v520
  %1634 = vmatmul.mubr.bf16.gmra.mrb[0].mxu0 %v519
  %v1635 = vpop.f32.mrb[0].mxu0
  %v1636 = vadd.f32 %v1572, %v1635
  %v1637 = vpop.f32.mrb[0].mxu0
  %v1638 = vpop.f32.mrb[0].mxu0
  %v1639 = vadd.f32 %v1575, %v1638
  %v1640 = vpop.f32.mrb[0].mxu0
  %1641 = vmatprep.mubr.bf16.mxu0 %v534
  %1642 = vmatmul.mubr.bf16.gmra.mrb[0].mxu0 %v533
  %v1643 = vpop.f32.mrb[0].mxu0
  %v1644 = vadd.f32 %v1580, %v1643
  %v1645 = vpop.f32.mrb[0].mxu0
  %v1646 = vpop.f32.mrb[0].mxu0
  %v1647 = vpop.f32.mrb[0].mxu0
  %1648 = vdwg.mxu0
  %1649 = vmatprep.subr.bf16.mxu0 0
  %1650 = vmatpush1.bf16.msra.mxu0 %v1137
  %1651 = vmatprep.subr.bf16.mxu0 0
  %1652 = vmatpush1.bf16.msra.mxu0 %v1138
  %1653 = vmatprep.subr.bf16.mxu0 0
  %1654 = vmatpush1.bf16.msra.mxu0 %v1139
  %1655 = vmatprep.subr.bf16.mxu0 0
  %1656 = vmatpush1.bf16.msra.mxu0 %v1140
  %1657 = vmatprep.subr.bf16.mxu0 0
  %1658 = vmatpush1.bf16.msra.mxu0 %v1141
  %1659 = vmatprep.subr.bf16.mxu0 0
  %1660 = vmatpush1.bf16.msra.mxu0 %v1142
  %1661 = vmatprep.subr.bf16.mxu0 0
  %1662 = vmatpush1.bf16.msra.mxu0 %v1143
  %1663 = vmatprep.subr.bf16.mxu0 0
  %1664 = vmatpush1.bf16.msra.mxu0 %v1144
  %1665 = vmatprep.subr.bf16.mxu0 0
  %1666 = vmatpush1.bf16.msra.mxu0 %v1145
  %1667 = vmatprep.subr.bf16.mxu0 0
  %1668 = vmatpush1.bf16.msra.mxu0 %v1146
  %1669 = vmatprep.subr.bf16.mxu0 0
  %1670 = vmatpush1.bf16.msra.mxu0 %v1147
  %1671 = vmatprep.subr.bf16.mxu0 0
  %1672 = vmatpush1.bf16.msra.mxu0 %v1148
  %1673 = vmatprep.subr.bf16.mxu0 0
  %1674 = vmatpush1.bf16.msra.mxu0 %v1149
  %1675 = vmatprep.subr.bf16.mxu0 0
  %1676 = vmatpush1.bf16.msra.mxu0 %v1150
  %1677 = vmatprep.subr.bf16.mxu0 0
  %1678 = vmatpush1.bf16.msra.mxu0 %v1151
  %1679 = vmatprep.subr.bf16.mxu0 0
  %1680 = vmatpush1.bf16.msra.mxu0 %v1152
  %1681 = vmatprep.mubr.bf16.mxu0 %v494
  %1682 = vmatmul.mubr.bf16.gmra.mrb[0].mxu0 %v493
  %v1683 = vpop.f32.mrb[0].mxu0
  %v1684 = vadd.f32 %v1620, %v1683
  %v1685 = vpop.f32.mrb[0].mxu0
  %v1686 = vpop.f32.mrb[0].mxu0
  %v1687 = vadd.f32 %v1623, %v1686
  %v1688 = vpop.f32.mrb[0].mxu0
  %1689 = vmatprep.mubr.bf16.mxu0 %v508
  %1690 = vmatmul.mubr.bf16.gmra.mrb[0].mxu0 %v507
  %v1691 = vpop.f32.mrb[0].mxu0
  %v1692 = vadd.f32 %v1628, %v1691
  %v1693 = vpop.f32.mrb[0].mxu0
  %v1694 = vpop.f32.mrb[0].mxu0
  %v1695 = vadd.f32 %v1631, %v1694
  %v1696 = vpop.f32.mrb[0].mxu0
  %1697 = vmatprep.mubr.bf16.mxu0 %v522
  %1698 = vmatmul.mubr.bf16.gmra.mrb[0].mxu0 %v521
  %v1699 = vpop.f32.mrb[0].mxu0
  %v1700 = vadd.f32 %v1636, %v1699
  %v1701 = vpop.f32.mrb[0].mxu0
  %v1702 = vpop.f32.mrb[0].mxu0
  %v1703 = vadd.f32 %v1639, %v1702
  %v1704 = vpop.f32.mrb[0].mxu0
  %1705 = vmatprep.mubr.bf16.mxu0 %v536
  %1706 = vmatmul.mubr.bf16.gmra.mrb[0].mxu0 %v535
  %v1707 = vpop.f32.mrb[0].mxu0
  %v1708 = vadd.f32 %v1644, %v1707
  %v1709 = vpop.f32.mrb[0].mxu0
  %v1710 = vpop.f32.mrb[0].mxu0
  %v1711 = vpop.f32.mrb[0].mxu0
  %1712 = vdwg.mxu0
  %1713 = vst [vmem:[%s2] sm:$0xff] %v1684
  %1714 = vst [vmem:[%s2 + $0x8] sm:$0xff] %v1687
  %1715 = vst [vmem:[%s2 + $0x10] sm:$0xff] %v1692
  %1716 = vst [vmem:[%s2 + $0x18] sm:$0xff] %v1695
  %1717 = vst [vmem:[%s2 + $0x20] sm:$0xff] %v1700
  %1718 = vst [vmem:[%s2 + $0x28] sm:$0xff] %v1703
  %1719 = vst [vmem:[%s2 + $0x30] sm:$0xff] %v1708
  // Predicated region
  $region10: #{relu_conv2d.1} parent=0 // pred_check
    _
  $region11: #{relu_conv2d.1} parent=0 // pred_check_branch
    %1721 = sbr.rel (0) target = $region13
  $region12: #{relu_conv2d.1} parent=0 // pred_region
    _
  $region13: #{relu_conv2d.1} parent=0 // pred_fallthru
    _
  // Predicated region
  $region14: #{relu_conv2d.1} parent=0 // pred_check
    _
  $region15: #{relu_conv2d.1} parent=0 // pred_check_branch
    %1723 = sbr.rel (0) target = $region17
  $region16: #{relu_conv2d.1} parent=0 // pred_region
    _
  $region17: #{relu_conv2d.1} parent=0 // pred_fallthru
    _

</llo_original>
